<compile_context>
chip_gen: v5e
topology: v5e:2x2
jax: 0.10.0
libtpu: 0.0.40
codegen_flags: <defaults>
</compile_context>

<pallas_src>
import jax
import jax.numpy as jnp
from jax import lax
from jax.experimental import pallas as pl
from jax.experimental.pallas import tpu as pltpu

_DMA_RING = 8                    # outstanding row DMAs per tile (gather path)
_MAX_TILE = 512                  # tokens per grid step
_SMALL_VOCAB_ROWS = 1024         # one-hot MXU path cutoff (rows)
_SMALL_VOCAB_BYTES = 4 * 1024 * 1024


def _round_up(x, m):
    return ((x + m - 1) // m) * m


# ---------------------------------------------------------------------------
# Path A: small vocab -> one-hot matmul on the MXU.
# ---------------------------------------------------------------------------
def _onehot_matmul_kernel(tok_ref, emb_ref, out_ref):
    """tok_ref: (tn, 1) i32 VMEM; emb_ref: (V, D) VMEM; out_ref: (tn, D) VMEM."""
    tn = out_ref.shape[0]
    V = emb_ref.shape[0]
    tok = tok_ref[...]                                           # (tn, 1) int32
    onehot = (tok == lax.broadcasted_iota(jnp.int32, (tn, V), 1))
    onehot = onehot.astype(emb_ref.dtype)
    out_ref[...] = jnp.dot(
        onehot, emb_ref[...], preferred_element_type=jnp.float32
    ).astype(out_ref.dtype)


def _embedding_onehot(tok_2d, emb, *, tn, n_pad):
    V, D = emb.shape
    itm = emb.dtype.itemsize
    # table (2 bufs) + id tiles + out tiles + one-hot intermediate, plus slack
    needed = 2 * V * D * itm + 2 * tn * 4 + 2 * tn * D * itm + tn * V * 4
    vmem_limit = int(min(max(needed + (8 << 20), 32 << 20), 128 << 20))
    return pl.pallas_call(
        _onehot_matmul_kernel,
        out_shape=jax.ShapeDtypeStruct((n_pad, D), emb.dtype),
        grid_spec=pltpu.PrefetchScalarGridSpec(
            num_scalar_prefetch=0,
            grid=(n_pad // tn,),
            in_specs=[
                pl.BlockSpec((tn, 1), lambda i: (i, 0)),         # ids for this tile
                pl.BlockSpec((V, D), lambda i: (0, 0)),          # table resident
            ],
            out_specs=pl.BlockSpec((tn, D), lambda i: (i, 0)),
        ),
        compiler_params=pltpu.CompilerParams(
            dimension_semantics=("parallel",),                   # shard tiles across TCs
            vmem_limit_bytes=vmem_limit,
        ),
    )(tok_2d, emb)


# ---------------------------------------------------------------------------
# Path B: large vocab -> table stays in HBM, ring of async row DMAs.
# ---------------------------------------------------------------------------
def _dma_gather_kernel(tok_ref, emb_hbm, out_ref, sem):
    """tok_ref: (n_pad,) i32 SMEM (scalar prefetch); emb_hbm: (V, D) HBM;
    out_ref: (tn, D) VMEM; sem: (K,) DMA semaphores."""
    i = pl.program_id(0)
    tn = out_ref.shape[0]
    K = sem.shape[0]
    base = pl.multiple_of(i * tn, tn)

    def row_copy(row, t, slot):
        return pltpu.make_async_copy(
            emb_hbm.at[pl.ds(row, 1), :],
            out_ref.at[pl.ds(t, 1), :],
            sem.at[slot],
        )

    def body(t, carry):
        slot = t % K

        @pl.when(t >= K)
        def _():
            # Retire the copy that used this slot K tokens ago (same row size).
            row_copy(0, 0, slot).wait()

        tok_id = tok_ref[base + t]                               # SMEM scalar read
        row_copy(tok_id, t, slot).start()
        return carry

    lax.fori_loop(0, tn, body, 0, unroll=8)

    # Drain every outstanding DMA before the tile is written back to HBM.
    def drain(s, carry):
        row_copy(0, 0, s).wait()
        return carry

    lax.fori_loop(0, min(K, tn), drain, 0, unroll=True)


def _embedding_dma_gather(tok_flat, emb, *, tn, n_pad):
    V, D = emb.shape
    itm = emb.dtype.itemsize
    needed = 2 * tn * D * itm                                    # out tile, 2 bufs
    vmem_limit = int(min(max(needed + (8 << 20), 32 << 20), 128 << 20))
    ring = min(_DMA_RING, tn)
    return pl.pallas_call(
        _dma_gather_kernel,
        out_shape=jax.ShapeDtypeStruct((n_pad, D), emb.dtype),
        grid_spec=pltpu.PrefetchScalarGridSpec(
            num_scalar_prefetch=1,                               # token ids -> SMEM
            grid=(n_pad // tn,),
            in_specs=[
                pl.BlockSpec(memory_space=pl.ANY),               # table stays in HBM
            ],
            out_specs=pl.BlockSpec((tn, D), lambda i, tok: (i, 0)),
            scratch_shapes=[pltpu.SemaphoreType.DMA((ring,))],
        ),
        compiler_params=pltpu.CompilerParams(
            dimension_semantics=("parallel",),
            vmem_limit_bytes=vmem_limit,
        ),
    )(tok_flat, emb)


# ---------------------------------------------------------------------------
# Wrapper: same semantics as TokenEmbedding.forward (nn.Embedding lookup).
# ---------------------------------------------------------------------------
def token_embedding(tokens, emb_table, *, max_tile=_MAX_TILE):
    """tokens: (B, S) int; emb_table: (V, D) -> (B, S, D)."""
    B, S = tokens.shape
    V, D = emb_table.shape
    N = B * S

    tn = min(max_tile, _round_up(N, 8))
    n_pad = _round_up(N, tn)

    # Clamp so in-kernel reads are never out of bounds (nn.Embedding would raise).
    tok_flat = jnp.clip(tokens.reshape(N).astype(jnp.int32), 0, V - 1)
    if n_pad != N:
        tok_flat = jnp.pad(tok_flat, (0, n_pad - N))             # pad ids -> row 0

    table_bytes = V * D * emb_table.dtype.itemsize
    if V <= _SMALL_VOCAB_ROWS and table_bytes <= _SMALL_VOCAB_BYTES:
        out_flat = _embedding_onehot(tok_flat.reshape(n_pad, 1), emb_table,
                                     tn=tn, n_pad=n_pad)
    else:
        out_flat = _embedding_dma_gather(tok_flat, emb_table, tn=tn, n_pad=n_pad)

    return out_flat[:N].reshape(B, S, D)


if __name__ == "__main__":
    key = jax.random.PRNGKey(0)
    k_emb, k_tok, k_emb2, k_tok2 = jax.random.split(key, 4)

    # Small shapes consistent with the module: batch=2, seq=8, vocab=64, d_model=32.
    B, S, V, D = 2, 8, 64, 32
    emb_table = jax.random.normal(k_emb, (V, D), dtype=jnp.float32)   # nn.Embedding ~ N(0,1)
    tokens = jax.random.randint(k_tok, (B, S), 0, V, dtype=jnp.int32)

    out = jax.block_until_ready(token_embedding(tokens, emb_table))
    ref = jnp.take(emb_table, tokens, axis=0)
    assert out.shape == (B, S, D)
    assert jnp.allclose(out, ref, rtol=1e-5, atol=1e-5), "one-hot MXU path mismatch"

    # Larger vocab exercises the HBM-resident DMA-gather path.
    V2, D2 = 2048, 256
    emb_table2 = jax.random.normal(k_emb2, (V2, D2), dtype=jnp.float32)
    tokens2 = jax.random.randint(k_tok2, (B, S), 0, V2, dtype=jnp.int32)

    out2 = jax.block_until_ready(token_embedding(tokens2, emb_table2))
    ref2 = jnp.take(emb_table2, tokens2, axis=0)
    assert out2.shape == (B, S, D2)
    assert jnp.array_equal(out2, ref2), "DMA-gather path mismatch"

    print("KERNEL_OK")
</pallas_src>

<mosaic_0001>
module attributes {stable_mosaic.version = 11 : i64} {
  func.func @_onehot_matmul_kernel(%arg0: i32, %arg1: memref<16x1xi32, #tpu.memory_space<vmem>>, %arg2: memref<64x32xf32, #tpu.memory_space<vmem>>, %arg3: memref<16x32xf32, #tpu.memory_space<vmem>>) attributes {dimension_semantics = [#tpu.dimension_semantics<parallel>], iteration_bounds = array<i64: 1>, scalar_prefetch = 0 : i64, scratch_operands = 0 : i64, tpu.core_type = #tpu.core_type<tc>, window_params = [{transform_indices = @transform_0, window_bounds = array<i64: 16, 1>}, {pipeline_mode = #tpu.pipeline_mode<synchronous>, transform_indices = @transform_1, window_bounds = array<i64: 64, 32>}, {transform_indices = @transform_2, window_bounds = array<i64: 16, 32>}]} {
    %c0 = arith.constant 0 : index
    %c0_0 = arith.constant 0 : index
    %0 = vector.load %arg1[%c0, %c0_0] : memref<16x1xi32, #tpu.memory_space<vmem>>, vector<16x1xi32>
    %1 = tpu.iota {dimensions = array<i32: 1>} : vector<16x64xi32>
    %2 = vector.broadcast %0 : vector<16x1xi32> to vector<16x64xi32>
    %3 = arith.cmpi eq, %2, %1 : vector<16x64xi32>
    %4 = arith.extui %3 : vector<16x64xi1> to vector<16x64xi32>
    %5 = arith.sitofp %4 : vector<16x64xi32> to vector<16x64xf32>
    %c0_1 = arith.constant 0 : index
    %c0_2 = arith.constant 0 : index
    %6 = vector.load %arg2[%c0_1, %c0_2] : memref<64x32xf32, #tpu.memory_space<vmem>>, vector<64x32xf32>
    %cst = arith.constant dense<0.000000e+00> : vector<16x32xf32>
    %7 = tpu.matmul %5, %6, %cst {dimension_numbers = #tpu.dot_dimension_numbers<[1], [0], [0], [1], [0, 0, 1, 1], [], []>} : vector<16x64xf32>, vector<64x32xf32>, vector<16x32xf32> -> vector<16x32xf32>
    %c0_3 = arith.constant 0 : index
    %c0_4 = arith.constant 0 : index
    %8 = vector.load %arg3[%c0_3, %c0_4] : memref<16x32xf32, #tpu.memory_space<vmem>>, vector<16x32xf32>
    tpu.vector_store %arg3[%c0_3, %c0_4], %7 {strides = array<i32>} : memref<16x32xf32, #tpu.memory_space<vmem>>, vector<16x32xf32>,
    return
  }
  func.func @transform_0(%arg0: i32) -> (i32, i32) {
    %c0_i32 = arith.constant 0 : i32
    %c0_i32_0 = arith.constant 0 : i32
    return %arg0, %c0_i32 : i32, i32
  }
  func.func @transform_1(%arg0: i32) -> (i32, i32) {
    %c0_i32 = arith.constant 0 : i32
    %c0_i32_0 = arith.constant 0 : i32
    %c0_i32_1 = arith.constant 0 : i32
    return %c0_i32, %c0_i32_0 : i32, i32
  }
  func.func @transform_2(%arg0: i32) -> (i32, i32) {
    %c0_i32 = arith.constant 0 : i32
    %c0_i32_0 = arith.constant 0 : i32
    return %arg0, %c0_i32 : i32, i32
  }
}

</mosaic_0001>

<llo_original>
// kernel: tpu_custom_call.1
$region0: #{tpu_custom_call.1}
  #allocation0 [shape = 'u32[]', space=smem, size = 0x4, offset = 0x4, fixed_abs, tag = 'smem constant byte address 0x4 - core index']
  #allocation1 [shape = 'u32[72,128]{1,0:T(1,128)}', space=vmem, size = 0x9000, scoped, tag = 'internal scratch']
  %s0 = inlined_call_operand.vmem [shape: s32[16,1], index: 0, kind: input, shape index: {}]
  %s1 = inlined_call_operand.vmem [shape: f32[64,32], index: 1, kind: input, shape index: {}]
  %s2 = inlined_call_operand.hbm [shape: f32[16,32], index: 2, kind: output, shape index: {}]
  %s3 = sld [smem:[#allocation0]]
  $region18: #{tpu_custom_call.1} parent=0
    _
  %s5 = ssub.s32 1, %s3
  %s6 = scalar_select 0, %s5, %s3
  $region1: #{tpu_custom_call.1} parent=0
    #allocation2 [shape = 'u8[8192]{0}', space=vmem, size = 0x2000, scoped, tag = 'output window, operand 0, single buffered']
    #allocation3 [shape = 's32[1]{0}', space=sflag, size = 0x4, scoped, tag = 'scoped memory for tpu_custom_call.1']
    %7 = vsyncpa [#allocation3], 0
    // Predicated region
    $region2: #{tpu_custom_call.1} parent=1 // pred_check
      _
    $region3: #{tpu_custom_call.1} parent=1 // pred_check_branch
      %9 = sbr.rel (0) target = $region5
    $region4: #{tpu_custom_call.1} parent=1 // pred_region
      _
    $region5: #{tpu_custom_call.1} parent=1 // pred_fallthru
      _
    // Predicated region
    $region6: #{tpu_custom_call.1} parent=1 // pred_check
      _
    $region7: #{tpu_custom_call.1} parent=1 // pred_check_branch
      %11 = sbr.rel (0) target = $region9
    $region8: #{tpu_custom_call.1} parent=1 // pred_region
      _
    $region9: #{tpu_custom_call.1} parent=1 // pred_fallthru
      _
    %v12 = vld [vmem:[%s0] sm:$0xff]
    %v13 = vld [vmem:[%s0 + $0x8] sm:$0xff]
    %v14 = vlaneseq
    %v15 = vand.u32 %v14, 127
    %16 = vset.pattern.permute.xlu0 0
    %17 = vperm.xlu0 %16, %v12
    %v18 = vpop.permute.xlu0 %17
    %19 = vset.pattern.permute.xlu0 0
    %20 = vperm.xlu0 %19, %v13
    %v21 = vpop.permute.xlu0 %20
    %vm22 = vcmp.eq.s32.totalorder %v18, %v15
    %vm23 = vcmp.eq.s32.totalorder %v21, %v15
    %v24 = vsel %vm22, 1, 0
    %v25 = vsel %vm23, 1, 0
    %v26 = vcvt.s32.f32 %v24
    %v27 = vcvt.s32.f32 %v25
    %v28 = vld [vmem:[%s1] sm:$0xff]
    %v29 = vld [vmem:[%s1 + $0x8] sm:$0xff]
    %v30 = vld [vmem:[%s1 + $0x10] sm:$0xff]
    %v31 = vld [vmem:[%s1 + $0x18] sm:$0xff]
    %v32 = vld [vmem:[%s1 + $0x20] sm:$0xff]
    %v33 = vld [vmem:[%s1 + $0x28] sm:$0xff]
    %v34 = vld [vmem:[%s1 + $0x30] sm:$0xff]
    %v35 = vld [vmem:[%s1 + $0x38] sm:$0xff]
    %vm36 = vcmask 523264
    %v38 = vsel %vm36, %v26, 0
    %v41 = vsel %vm36, %v27, 0
    %43 = vmatpush.msra.mxu0 0.0
    %44 = vmatpush.msra.mxu0 0.0
    %45 = vmatpush.msra.mxu0 0.0
    %46 = vmatpush.msra.mxu0 0.0
    %47 = vmatpush.msra.mxu0 0.0
    %48 = vmatpush.msra.mxu0 0.0
    %49 = vmatpush.msra.mxu0 0.0
    %50 = vmatpush.msra.mxu0 0.0
    %51 = vmatpush.msra.mxu0 %v35
    %52 = vmatpush.msra.mxu0 %v34
    %53 = vmatpush.msra.mxu0 %v33
    %54 = vmatpush.msra.mxu0 %v32
    %55 = vmatpush.msra.mxu0 %v31
    %56 = vmatpush.msra.mxu0 %v30
    %57 = vmatpush.msra.mxu0 %v29
    %58 = vmatpush.msra.mxu0 %v28
    %59 = vmatmul.f32.gmra.mxu0 %v38
    %v60 = vpop.f32.mrf.mxu0
    %v61 = vadd.f32 0.0, %v60
    %62 = vmatmul.f32.gmra.mxu0 %v41
    %v63 = vpop.f32.mrf.mxu0
    %v64 = vadd.f32 0.0, %v63
    %65 = vdwg.mxu0
    %vm66 = vcmask 261120
    %67 = vst.msk [vmem:[#allocation2] sm:$0xff] %vm66, %v61
    %68 = vst.msk [vmem:[#allocation2 + $0x8] sm:$0xff] %vm66, %v64
    // Predicated region
    $region10: #{tpu_custom_call.1} parent=1 // pred_check
      _
    $region11: #{tpu_custom_call.1} parent=1 // pred_check_branch
      %70 = sbr.rel (0) target = $region13
    $region12: #{tpu_custom_call.1} parent=1 // pred_region
      %72 = vsyncadd [#allocation3], 0
      %s73 = sshll.u32 [#allocation2], 4
      %s74 = int_to_ptr.vmem [resolvable:$true] %s73
      %s75 = sshll.u32 %s2, 4
      %s76 = int_to_ptr.hbm [resolvable:$true] %s75
      %81 = dma.vmem_to_hbm [thread:$0]  %s74, 256, %s76, [#allocation3], 128, 128, 8
    $region13: #{tpu_custom_call.1} parent=1 // pred_fallthru
      _
    // Predicated region
    $region14: #{tpu_custom_call.1} parent=1 // pred_check
      _
    $region15: #{tpu_custom_call.1} parent=1 // pred_check_branch
      %83 = sbr.rel (0) target = $region17
    $region16: #{tpu_custom_call.1} parent=1 // pred_region
      %85 = dma.done [#allocation3], 256
    $region17: #{tpu_custom_call.1} parent=1 // pred_fallthru
      _
    %86 = vsyncpa [#allocation3], 1

</llo_original>
